<compile_context>
chip_gen: v7x
topology: tpu7x:2x2x1
jax: 0.10.0
libtpu: 0.0.40
codegen_flags: <defaults>
</compile_context>

<pallas_src>
import functools
import math

import jax
import jax.numpy as jnp
from jax.experimental import pallas as pl
from jax.experimental.pallas import tpu as pltpu

LN_EPS = 1e-5                      # nn.LayerNorm default
_GELU_C = math.sqrt(2.0 / math.pi)


# ---------------------------------------------------------------------------
# small helpers
# ---------------------------------------------------------------------------

def _round_up(n, m):
    return ((n + m - 1) // m) * m


def _tpu_kind():
    try:
        return jax.devices()[0].device_kind.lower()
    except Exception:  # pragma: no cover
        return ""


@functools.lru_cache(maxsize=None)
def _vmem_limit_bytes(default=48 * 1024 * 1024):
    """~75% of physical VMEM: ~96 MiB on v5e/v6e (128 MiB), ~48 MiB on v7x (64 MiB)."""
    try:
        info = pltpu.get_tpu_info()
        cap = getattr(info, "vmem_capacity_bytes", None)
        if cap:
            return int(cap) * 3 // 4
    except Exception:  # pragma: no cover - conservative fallback
        pass
    return default


@functools.lru_cache(maxsize=None)
def _default_token_tile():
    # 512 rows on 128-MiB-VMEM chips (v5e/v6e); 256 on 64-MiB chips (v7x) / unknown.
    return 512 if _vmem_limit_bytes() >= 90 * 1024 * 1024 else 256


@functools.lru_cache(maxsize=None)
def _use_bf16_gelu():
    # v6e / v7x have bf16 VPU + EUP; v5e (and older) do not -> keep f32 there.
    kind = _tpu_kind()
    return ("v6" in kind) or ("v7" in kind)


def _pad_rows(a, m_pad):
    m = a.shape[0]
    if m == m_pad:
        return a
    return jnp.pad(a, ((0, m_pad - m), (0, 0)))


def _layer_norm(x, gamma, beta):
    mu = jnp.mean(x, axis=-1, keepdims=True)
    xc = x - mu
    var = jnp.mean(xc * xc, axis=-1, keepdims=True)
    return xc * jax.lax.rsqrt(var + LN_EPS) * gamma + beta


def _gelu_tanh(h):
    # Matches PyTorch GELUActivation (tanh approximation).
    return 0.5 * h * (1.0 + jnp.tanh(_GELU_C * (h + 0.044715 * h * h * h)))


def _cost(flops, transcendentals, bytes_accessed):
    return pl.CostEstimate(flops=int(flops), transcendentals=int(transcendentals),
                           bytes_accessed=int(bytes_accessed))


# ---------------------------------------------------------------------------
# kernels
# ---------------------------------------------------------------------------

def _ln_qkv_kernel(x_ref, g_ref, b_ref, w_ref, bias_ref, o_ref):
    # x:(tm,D) f32 | gamma/beta:(1,D) f32 | w:(D,3D) bf16 | bias:(1,3D) f32 -> (tm,3D) bf16
    x = x_ref[...].astype(jnp.float32)
    n = _layer_norm(x, g_ref[...], b_ref[...])
    y = jnp.dot(n.astype(w_ref.dtype), w_ref[...],
                preferred_element_type=jnp.float32) + bias_ref[...]
    o_ref[...] = y.astype(o_ref.dtype)


def _attn_kernel(qkv_ref, o_ref, *, num_heads, head_dim, scale):
    # One grid step per batch. qkv_ref:(S, 3D) bf16, token-major; o_ref:(S, D) bf16.
    # All heads processed in-kernel (no HBM head-major intermediate, no XLA transpose).
    D = num_heads * head_dim
    for h in range(num_heads):           # static loop, fully visible to the scheduler
        lo = h * head_dim
        q = (qkv_ref[:, lo:lo + head_dim].astype(jnp.float32) * scale).astype(jnp.bfloat16)
        k = qkv_ref[:, D + lo:D + lo + head_dim]
        v = qkv_ref[:, 2 * D + lo:2 * D + lo + head_dim]
        # s = q @ k^T  (contract head_dim of both operands)
        s = jax.lax.dot_general(q, k, (((1,), (1,)), ((), ())),
                                preferred_element_type=jnp.float32)
        s = s - jnp.max(s, axis=-1, keepdims=True)
        p = jnp.exp(s)
        p = p * pl.reciprocal(jnp.sum(p, axis=-1, keepdims=True), approx=True)
        o = jnp.dot(p.astype(jnp.bfloat16), v, preferred_element_type=jnp.float32)
        o_ref[:, lo:lo + head_dim] = o.astype(o_ref.dtype)


def _proj_ffn_kernel(attn_ref, x_ref, g_ref, b_ref, wo_ref, bo_ref,
                     w1_ref, b1_ref, w2_ref, b2_ref, o_ref, *, bf16_gelu):
    # out = x1 + fc2(gelu_tanh(fc1(LN(x1)))),  x1 = x + attn @ Wo + bo
    x = x_ref[...].astype(jnp.float32)
    y = jnp.dot(attn_ref[...], wo_ref[...],
                preferred_element_type=jnp.float32) + bo_ref[...]
    x1 = x + y
    n = _layer_norm(x1, g_ref[...], b_ref[...])
    h = jnp.dot(n.astype(w1_ref.dtype), w1_ref[...],
                preferred_element_type=jnp.float32) + b1_ref[...]
    if bf16_gelu:
        g = _gelu_tanh(h.astype(jnp.bfloat16))           # bf16 VPU/EUP on v6e/v7x
    else:
        g = _gelu_tanh(h).astype(jnp.bfloat16)           # f32 path on v5e/older
    y2 = jnp.dot(g.astype(w2_ref.dtype), w2_ref[...],
                 preferred_element_type=jnp.float32) + b2_ref[...]
    o_ref[...] = (x1 + y2).astype(o_ref.dtype)


# ---------------------------------------------------------------------------
# pallas_call wrappers
# ---------------------------------------------------------------------------

def _token_tiled_call(kernel, row_inputs, resident_inputs, *,
                      out_cols, tm, out_dtype, cost=None):
    """Run `kernel` over a 1-D token grid (rows tiled by tm, cdiv + zero padding)."""
    m = row_inputs[0].shape[0]
    tm_eff = min(tm, _round_up(m, 8))
    m_pad = _round_up(m, tm_eff)
    grid = m_pad // tm_eff
    row_inputs = [_pad_rows(a, m_pad) for a in row_inputs]

    in_specs = [pl.BlockSpec((tm_eff, a.shape[1]), lambda i: (i, 0))
                for a in row_inputs]
    # Resident operands (weights / biases / LN params): constant block index,
    # fetched once and kept in VMEM across all grid steps.
    in_specs += [pl.BlockSpec(tuple(a.shape), lambda i, n=a.ndim: (0,) * n)
                 for a in resident_inputs]

    out = pl.pallas_call(
        kernel,
        out_shape=jax.ShapeDtypeStruct((m_pad, out_cols), out_dtype),
        grid_spec=pltpu.PrefetchScalarGridSpec(
            num_scalar_prefetch=0,
            grid=(grid,),
            in_specs=in_specs,
            out_specs=pl.BlockSpec((tm_eff, out_cols), lambda i: (i, 0)),
        ),
        compiler_params=pltpu.CompilerParams(
            dimension_semantics=("parallel",),
            vmem_limit_bytes=_vmem_limit_bytes(),
        ),
        cost_estimate=cost,
    )(*row_inputs, *resident_inputs)
    return out[:m]


def _mha_fused(qkv3, *, num_heads, head_dim, cost=None):
    """Attention from the token-major qkv slab: (B, S, 3D) bf16 -> (B, S, D) bf16."""
    B, S, threeD = qkv3.shape
    D = num_heads * head_dim
    kernel = functools.partial(_attn_kernel, num_heads=num_heads, head_dim=head_dim,
                               scale=1.0 / math.sqrt(head_dim))
    return pl.pallas_call(
        kernel,
        out_shape=jax.ShapeDtypeStruct((B, S, D), jnp.bfloat16),
        grid_spec=pltpu.PrefetchScalarGridSpec(
            num_scalar_prefetch=0,
            grid=(B,),
            in_specs=[pl.BlockSpec((None, S, threeD), lambda b: (b, 0, 0))],
            out_specs=pl.BlockSpec((None, S, D), lambda b: (b, 0, 0)),
        ),
        compiler_params=pltpu.CompilerParams(
            dimension_semantics=("parallel",),
            vmem_limit_bytes=_vmem_limit_bytes(),
        ),
        cost_estimate=cost,
    )(qkv3)


# ---------------------------------------------------------------------------
# EncoderLayer forward
# ---------------------------------------------------------------------------

def encoder_layer(x, params, *, tm=None):
    """Pallas forward of EncoderLayer (inference). x: (B, S, D) float32."""
    B, S, D = x.shape
    nH = int(params["num_heads"])
    assert D % nH == 0, "embed_dim must be divisible by num_heads"
    dH = D // nH
    M = B * S
    if tm is None:
        tm = _default_token_tile()

    f32, bf16 = jnp.float32, jnp.bfloat16
    gamma = params["ln_gamma"].reshape(1, D).astype(f32)
    beta = params["ln_beta"].reshape(1, D).astype(f32)
    # bf16 weights -> native MXU path + half the resident VMEM; biases stay f32.
    w_qkv = params["w_qkv"].astype(bf16)
    b_qkv = params["b_qkv"].reshape(1, 3 * D).astype(f32)
    w_o = params["w_o"].astype(bf16)
    b_o = params["b_o"].reshape(1, D).astype(f32)
    w1 = params["w1"].astype(bf16)
    b1 = params["b1"].reshape(1, -1).astype(f32)
    w2 = params["w2"].astype(bf16)
    b2 = params["b2"].reshape(1, D).astype(f32)
    Hd = w1.shape[1]

    x2d = x.reshape(M, D).astype(f32)

    # 1) fused LayerNorm + QKV projection: qkv = LN(x) @ Wqkv + bqkv    (bf16 out)
    qkv = _token_tiled_call(
        _ln_qkv_kernel, [x2d], [gamma, beta, w_qkv, b_qkv],
        out_cols=3 * D, tm=tm, out_dtype=bf16,
        cost=_cost(2 * M * D * 3 * D + 10 * M * D, M,
                   M * D * 4 + D * 3 * D * 2 + 5 * D * 4 + M * 3 * D * 2))

    # 2) attention straight from the token-major qkv slab (free reshape, no transpose)
    qkv3 = qkv.reshape(B, S, 3 * D)
    attn = _mha_fused(
        qkv3, num_heads=nH, head_dim=dH,
        cost=_cost(4 * B * nH * S * S * dH, B * nH * S * S,
                   M * 3 * D * 2 + M * D * 2))
    attn2d = attn.reshape(M, D)                          # free reshape, already token-major

    # 3) fused out-projection + residual + LayerNorm + FFN + residual
    kernel3 = functools.partial(_proj_ffn_kernel, bf16_gelu=_use_bf16_gelu())
    y = _token_tiled_call(
        kernel3, [attn2d, x2d],
        [gamma, beta, w_o, b_o, w1, b1, w2, b2],
        out_cols=D, tm=tm, out_dtype=f32,
        cost=_cost(2 * M * D * D + 4 * M * D * Hd + 15 * M * Hd,
                   M * Hd + 2 * M,
                   M * D * 2 + M * D * 4 + (D * D + 2 * D * Hd) * 2
                   + (2 * D + Hd) * 4 + 2 * D * 4 + M * D * 4))

    return y.reshape(B, S, D).astype(x.dtype)


# ---------------------------------------------------------------------------
# parameters + pure-JAX reference
# ---------------------------------------------------------------------------

def init_encoder_layer_params(key, embed_dim, num_heads, expansion, dtype=jnp.float32):
    D, H = embed_dim, embed_dim * expansion
    ks = jax.random.split(key, 10)

    def lin(kw, kb, fan_in, fan_out):
        bound = 1.0 / math.sqrt(fan_in)
        w = jax.random.uniform(kw, (fan_in, fan_out), dtype, -bound, bound)
        b = jax.random.uniform(kb, (fan_out,), dtype, -bound, bound)
        return w, b

    w_qkv, b_qkv = lin(ks[0], ks[1], D, 3 * D)
    w_o, b_o = lin(ks[2], ks[3], D, D)
    w1, b1 = lin(ks[4], ks[5], D, H)
    w2, b2 = lin(ks[6], ks[7], H, D)
    return dict(
        num_heads=num_heads,
        ln_gamma=1.0 + 0.1 * jax.random.normal(ks[8], (D,), dtype),
        ln_beta=0.1 * jax.random.normal(ks[9], (D,), dtype),
        w_qkv=w_qkv, b_qkv=b_qkv, w_o=w_o, b_o=b_o,
        w1=w1, b1=b1, w2=w2, b2=b2,
    )


def encoder_layer_ref(x, params):
    """Pure-JAX f32 reference mirroring the PyTorch EncoderLayer (eval mode)."""
    B, S, D = x.shape
    nH = int(params["num_heads"]); dH = D // nH
    g, b = params["ln_gamma"], params["ln_beta"]

    def ln(z):
        mu = jnp.mean(z, -1, keepdims=True)
        var = jnp.mean((z - mu) ** 2, -1, keepdims=True)
        return (z - mu) / jnp.sqrt(var + LN_EPS) * g + b

    n1 = ln(x)
    qkv = n1 @ params["w_qkv"] + params["b_qkv"]
    q, k, v = jnp.split(qkv, 3, axis=-1)
    heads = lambda t: t.reshape(B, S, nH, dH).transpose(0, 2, 1, 3)
    qh, kh, vh = heads(q), heads(k), heads(v)
    s = jnp.einsum("bhqd,bhkd->bhqk", qh, kh) / math.sqrt(dH)
    p = jax.nn.softmax(s, axis=-1)
    o = jnp.einsum("bhqk,bhkd->bhqd", p, vh)
    o = o.transpose(0, 2, 1, 3).reshape(B, S, D)
    x = x + o @ params["w_o"] + params["b_o"]
    n2 = ln(x)
    h = n2 @ params["w1"] + params["b1"]
    gelu = 0.5 * h * (1.0 + jnp.tanh(_GELU_C * (h + 0.044715 * h ** 3)))
    return x + gelu @ params["w2"] + params["b2"]


if __name__ == "__main__":
    # Small ViT-ish shapes: batch=2, seq=8, embed_dim=32, heads=4, expansion=4.
    B, S, D, num_heads, expansion = 2, 8, 32, 4, 4

    key = jax.random.PRNGKey(0)
    kx, kp = jax.random.split(key)
    x = jax.random.normal(kx, (B, S, D), dtype=jnp.float32)
    params = init_encoder_layer_params(kp, D, num_heads, expansion)

    y = encoder_layer(x, params)
    jax.block_until_ready(y)

    y_ref = encoder_layer_ref(x, params)
    assert y.shape == (B, S, D)
    err = float(jnp.max(jnp.abs(y - y_ref)))
    # bf16 matmul operands + bf16 qkv/attn/gelu intermediates (f32 accumulation)
    # -> relaxed tolerance vs. the pure-f32 reference.
    assert jnp.allclose(y, y_ref, atol=7.5e-2, rtol=7.5e-2), f"mismatch vs reference: {err}"

    print("KERNEL_OK")
</pallas_src>

<mosaic_0001>
module attributes {stable_mosaic.version = 11 : i64} {
  func.func @_ln_qkv_kernel(%arg0: i32, %arg1: memref<16x32xf32, #tpu.memory_space<vmem>>, %arg2: memref<1x32xf32, #tpu.memory_space<vmem>>, %arg3: memref<1x32xf32, #tpu.memory_space<vmem>>, %arg4: memref<32x96xbf16, #tpu.memory_space<vmem>>, %arg5: memref<1x96xf32, #tpu.memory_space<vmem>>, %arg6: memref<16x96xbf16, #tpu.memory_space<vmem>>) attributes {dimension_semantics = [#tpu.dimension_semantics<parallel>], iteration_bounds = array<i64: 1>, scalar_prefetch = 0 : i64, scratch_operands = 0 : i64, tpu.core_type = #tpu.core_type<tc>, window_params = [{transform_indices = @transform_0, window_bounds = array<i64: 16, 32>}, {pipeline_mode = #tpu.pipeline_mode<synchronous>, transform_indices = @transform_1, window_bounds = array<i64: 1, 32>}, {pipeline_mode = #tpu.pipeline_mode<synchronous>, transform_indices = @transform_2, window_bounds = array<i64: 1, 32>}, {pipeline_mode = #tpu.pipeline_mode<synchronous>, transform_indices = @transform_3, window_bounds = array<i64: 32, 96>}, {pipeline_mode = #tpu.pipeline_mode<synchronous>, transform_indices = @transform_4, window_bounds = array<i64: 1, 96>}, {transform_indices = @transform_5, window_bounds = array<i64: 16, 96>}]} {
    %c0 = arith.constant 0 : index
    %c0_0 = arith.constant 0 : index
    %0 = vector.load %arg1[%c0, %c0_0] : memref<16x32xf32, #tpu.memory_space<vmem>>, vector<16x32xf32>
    %c0_1 = arith.constant 0 : index
    %c0_2 = arith.constant 0 : index
    %1 = vector.load %arg2[%c0_1, %c0_2] : memref<1x32xf32, #tpu.memory_space<vmem>>, vector<1x32xf32>
    %c0_3 = arith.constant 0 : index
    %c0_4 = arith.constant 0 : index
    %2 = vector.load %arg3[%c0_3, %c0_4] : memref<1x32xf32, #tpu.memory_space<vmem>>, vector<1x32xf32>
    %cst = arith.constant dense<0.000000e+00> : vector<16xf32>
    %3 = vector.multi_reduction <add>, %0, %cst [1] : vector<16x32xf32> to vector<16xf32>
    %4 = vector.shape_cast %3 : vector<16xf32> to vector<16x1xf32>
    %cst_5 = arith.constant 3.200000e+01 : f32
    %5 = vector.broadcast %cst_5 : f32 to vector<16x1xf32>
    %6 = arith.divf %4, %5 : vector<16x1xf32>
    %7 = vector.broadcast %6 : vector<16x1xf32> to vector<16x32xf32>
    %8 = arith.subf %0, %7 : vector<16x32xf32>
    %9 = arith.mulf %8, %8 : vector<16x32xf32>
    %cst_6 = arith.constant dense<0.000000e+00> : vector<16xf32>
    %10 = vector.multi_reduction <add>, %9, %cst_6 [1] : vector<16x32xf32> to vector<16xf32>
    %11 = vector.shape_cast %10 : vector<16xf32> to vector<16x1xf32>
    %cst_7 = arith.constant 3.200000e+01 : f32
    %12 = vector.broadcast %cst_7 : f32 to vector<16x1xf32>
    %13 = arith.divf %11, %12 : vector<16x1xf32>
    %cst_8 = arith.constant 9.99999974E-6 : f32
    %14 = vector.broadcast %cst_8 : f32 to vector<16x1xf32>
    %15 = arith.addf %13, %14 : vector<16x1xf32>
    %16 = math.rsqrt %15 : vector<16x1xf32>
    %17 = vector.broadcast %16 : vector<16x1xf32> to vector<16x32xf32>
    %18 = arith.mulf %8, %17 : vector<16x32xf32>
    %19 = vector.broadcast %1 : vector<1x32xf32> to vector<16x32xf32>
    %20 = arith.mulf %18, %19 : vector<16x32xf32>
    %21 = vector.broadcast %2 : vector<1x32xf32> to vector<16x32xf32>
    %22 = arith.addf %20, %21 : vector<16x32xf32>
    %23 = arith.truncf %22 : vector<16x32xf32> to vector<16x32xbf16>
    %c0_9 = arith.constant 0 : index
    %c0_10 = arith.constant 0 : index
    %24 = vector.load %arg4[%c0_9, %c0_10] : memref<32x96xbf16, #tpu.memory_space<vmem>>, vector<32x96xbf16>
    %cst_11 = arith.constant dense<0.000000e+00> : vector<16x96xf32>
    %25 = tpu.matmul %23, %24, %cst_11 {dimension_numbers = #tpu.dot_dimension_numbers<[1], [0], [0], [1], [0, 0, 1, 1], [], []>} : vector<16x32xbf16>, vector<32x96xbf16>, vector<16x96xf32> -> vector<16x96xf32>
    %c0_12 = arith.constant 0 : index
    %c0_13 = arith.constant 0 : index
    %26 = vector.load %arg5[%c0_12, %c0_13] : memref<1x96xf32, #tpu.memory_space<vmem>>, vector<1x96xf32>
    %27 = vector.broadcast %26 : vector<1x96xf32> to vector<16x96xf32>
    %28 = arith.addf %25, %27 : vector<16x96xf32>
    %29 = arith.truncf %28 : vector<16x96xf32> to vector<16x96xbf16>
    %c0_14 = arith.constant 0 : index
    %c0_15 = arith.constant 0 : index
    %30 = vector.load %arg6[%c0_14, %c0_15] : memref<16x96xbf16, #tpu.memory_space<vmem>>, vector<16x96xbf16>
    tpu.vector_store %arg6[%c0_14, %c0_15], %29 {strides = array<i32>} : memref<16x96xbf16, #tpu.memory_space<vmem>>, vector<16x96xbf16>,
    return
  }
  func.func @transform_0(%arg0: i32) -> (i32, i32) {
    %c0_i32 = arith.constant 0 : i32
    %c0_i32_0 = arith.constant 0 : i32
    return %arg0, %c0_i32 : i32, i32
  }
  func.func @transform_1(%arg0: i32) -> (i32, i32) {
    %c0_i32 = arith.constant 0 : i32
    %c0_i32_0 = arith.constant 0 : i32
    %c0_i32_1 = arith.constant 0 : i32
    return %c0_i32, %c0_i32_0 : i32, i32
  }
  func.func @transform_2(%arg0: i32) -> (i32, i32) {
    %c0_i32 = arith.constant 0 : i32
    %c0_i32_0 = arith.constant 0 : i32
    %c0_i32_1 = arith.constant 0 : i32
    return %c0_i32, %c0_i32_0 : i32, i32
  }
  func.func @transform_3(%arg0: i32) -> (i32, i32) {
    %c0_i32 = arith.constant 0 : i32
    %c0_i32_0 = arith.constant 0 : i32
    %c0_i32_1 = arith.constant 0 : i32
    return %c0_i32, %c0_i32_0 : i32, i32
  }
  func.func @transform_4(%arg0: i32) -> (i32, i32) {
    %c0_i32 = arith.constant 0 : i32
    %c0_i32_0 = arith.constant 0 : i32
    %c0_i32_1 = arith.constant 0 : i32
    return %c0_i32, %c0_i32_0 : i32, i32
  }
  func.func @transform_5(%arg0: i32) -> (i32, i32) {
    %c0_i32 = arith.constant 0 : i32
    %c0_i32_0 = arith.constant 0 : i32
    return %arg0, %c0_i32 : i32, i32
  }
}

</mosaic_0001>

<llo_original>
// kernel: tpu_custom_call.1
$region0: #{tpu_custom_call.1}
  #allocation0 [shape = 'u32[]', space=smem, size = 0x4, offset = 0x4, fixed_abs, tag = 'smem constant byte address 0x4 - core index']
  #allocation1 [shape = 'u32[144,128]{1,0:T(1,128)}', space=vmem, size = 0x12000, scoped, tag = 'internal scratch']
  %s0 = inlined_call_operand.hbm [shape: f32[16,32], index: 0, kind: input, shape index: {}]
  %s1 = inlined_call_operand.vmem [shape: f32[1,32], index: 1, kind: input, shape index: {}]
  %s2 = inlined_call_operand.vmem [shape: f32[1,32], index: 2, kind: input, shape index: {}]
  %s3 = inlined_call_operand.hbm [shape: bf16[32,96], index: 3, kind: input, shape index: {}]
  %s4 = inlined_call_operand.vmem [shape: f32[1,96], index: 4, kind: input, shape index: {}]
  %s5 = inlined_call_operand.hbm [shape: bf16[16,96], index: 5, kind: output, shape index: {}]
  %s6 = sld [smem:[#allocation0]]
  $region38: #{tpu_custom_call.1} parent=0
    _
  %s8 = ssub.s32 1, %s6
  %s9 = scalar_select 0, %s8, %s6
  $region1: #{tpu_custom_call.1} parent=0
    #allocation2 [shape = 'u8[8192]{0}', space=vmem, size = 0x2000, scoped, tag = 'input window, operand 0, single buffered']
    #allocation3 [shape = 's32[1]{0}', space=sflag, size = 0x4, scoped, tag = 'scoped memory for tpu_custom_call.1']
    #allocation4 [shape = 's32[1]{0}', space=sflag, size = 0x4, scoped, tag = 'scoped memory for tpu_custom_call.1']
    #allocation5 [shape = 'u8[8192]{0}', space=vmem, size = 0x2000, scoped, tag = 'input window, operand 3, single buffered']
    #allocation6 [shape = 's32[1]{0}', space=sflag, size = 0x4, scoped, tag = 'scoped memory for tpu_custom_call.1']
    #allocation7 [shape = 'u8[4096]{0}', space=vmem, size = 0x1000, scoped, tag = 'output window, operand 0, single buffered']
    %10 = vsyncpa [#allocation3], 0
    %11 = vsyncpa [#allocation6], 0
    %12 = vsyncpa [#allocation4], 0
    // Predicated region
    $region2: #{tpu_custom_call.1} parent=1 // pred_check
      _
    $region3: #{tpu_custom_call.1} parent=1 // pred_check_branch
      %14 = sbr.rel (0) target = $region5
    $region4: #{tpu_custom_call.1} parent=1 // pred_region
      %s16 = ssub.s32 256, 256
      %17 = vsyncadd [#allocation3], %s16
      %s18 = sshll.u32 [#allocation2], 4
      %s19 = int_to_ptr.vmem [resolvable:$true] %s18
      %24 = dma.hbm_to_vmem [thread:$0]  %s0, 256, %s19, [#allocation3], 128, 128, 8
    $region5: #{tpu_custom_call.1} parent=1 // pred_fallthru
      _
    // Predicated region
    $region6: #{tpu_custom_call.1} parent=1 // pred_check
      _
    $region7: #{tpu_custom_call.1} parent=1 // pred_check_branch
      %26 = sbr.rel (0) target = $region9
    $region8: #{tpu_custom_call.1} parent=1 // pred_region
      _
    $region9: #{tpu_custom_call.1} parent=1 // pred_fallthru
      _
    // Predicated region
    $region10: #{tpu_custom_call.1} parent=1 // pred_check
      _
    $region11: #{tpu_custom_call.1} parent=1 // pred_check_branch
      %28 = sbr.rel (0) target = $region13
    $region12: #{tpu_custom_call.1} parent=1 // pred_region
      _
    $region13: #{tpu_custom_call.1} parent=1 // pred_fallthru
      _
    // Predicated region
    $region14: #{tpu_custom_call.1} parent=1 // pred_check
      _
    $region15: #{tpu_custom_call.1} parent=1 // pred_check_branch
      %30 = sbr.rel (0) target = $region17
    $region16: #{tpu_custom_call.1} parent=1 // pred_region
      %s32 = ssub.s32 256, 256
      %33 = vsyncadd [#allocation6], %s32
      %s34 = sshll.u32 [#allocation5], 4
      %s35 = int_to_ptr.vmem [resolvable:$true] %s34
      %40 = dma.hbm_to_vmem [thread:$0]  %s3, 256, %s35, [#allocation6], 64, 64, 4
    $region17: #{tpu_custom_call.1} parent=1 // pred_fallthru
      _
    // Predicated region
    $region18: #{tpu_custom_call.1} parent=1 // pred_check
      _
    $region19: #{tpu_custom_call.1} parent=1 // pred_check_branch
      %42 = sbr.rel (0) target = $region21
    $region20: #{tpu_custom_call.1} parent=1 // pred_region
      _
    $region21: #{tpu_custom_call.1} parent=1 // pred_fallthru
      _
    // Predicated region
    $region22: #{tpu_custom_call.1} parent=1 // pred_check
      _
    $region23: #{tpu_custom_call.1} parent=1 // pred_check_branch
      %44 = sbr.rel (0) target = $region25
    $region24: #{tpu_custom_call.1} parent=1 // pred_region
      %45 = dma.done [#allocation3], 256
    $region25: #{tpu_custom_call.1} parent=1 // pred_fallthru
      _
    // Predicated region
    $region26: #{tpu_custom_call.1} parent=1 // pred_check
      _
    $region27: #{tpu_custom_call.1} parent=1 // pred_check_branch
      %47 = sbr.rel (0) target = $region29
    $region28: #{tpu_custom_call.1} parent=1 // pred_region
      %48 = dma.done [#allocation6], 256
    $region29: #{tpu_custom_call.1} parent=1 // pred_fallthru
      _
    %v50 = vld [vmem:[#allocation2] sm:$0xff]
    %v51 = vld [vmem:[#allocation2 + $0x8] sm:$0xff]
    %v52 = vld [vmem:[%s1] sm:$0x1]
    %v53 = vld [vmem:[%s2] sm:$0x1]
    %vm54 = vcmask 261120
    %v55 = vsel %vm54, %v50, 0.0
    %56 = vadd.xlane.f32.xlu0 %v55
    %v57 = vpop.xlane.xlu0 %56
    %v58 = vsel %vm54, %v51, 0.0
    %59 = vadd.xlane.f32.xlu0 %v58
    %v60 = vpop.xlane.xlu0 %59
    %v61 = vrcp.pop 32.0
    %v62 = vmul.f32 %v57, %v61
    %v63 = vmul.f32 %v60, %v61
    %v64 = vsub.f32 %v50, %v62
    %v65 = vsub.f32 %v51, %v63
    %v66 = vmul.f32 %v64, %v64
    %v67 = vmul.f32 %v65, %v65
    %v68 = vsel %vm54, %v66, 0.0
    %69 = vadd.xlane.f32.xlu0 %v68
    %v70 = vpop.xlane.xlu0 %69
    %v71 = vsel %vm54, %v67, 0.0
    %72 = vadd.xlane.f32.xlu0 %v71
    %v73 = vpop.xlane.xlu0 %72
    %v74 = vmul.f32 %v70, %v61
    %v75 = vmul.f32 %v73, %v61
    %v76 = vadd.f32 %v74, 1e-05
    %v77 = vadd.f32 %v75, 1e-05
    %v78 = vrsqrt.pop %v76
    %v79 = vrsqrt.pop %v77
    %v80 = vmul.f32 %v64, %v78
    %v81 = vmul.f32 %v65, %v79
    %v83 = vlaneseq
    %v84 = vshrl.u32 %v83, 7
    %v85 = vsub.s32 0, %v84
    %v86 = vrot.slane %v52, %v85
    %v88 = vmul.f32 %v80, %v86
    %v89 = vmul.f32 %v81, %v86
    %v91 = vlaneseq
    %v92 = vshrl.u32 %v91, 7
    %v93 = vsub.s32 0, %v92
    %v94 = vrot.slane %v53, %v93
    %v96 = vadd.f32 %v88, %v94
    %v97 = vadd.f32 %v89, %v94
    %v98 = vpack.c.bf16 %v97, %v96
    %v99 = vld [vmem:[#allocation5] sm:$0xf]
    %v100 = vld [vmem:[#allocation5 + $0x4] sm:$0xf]
    %v101 = vld [vmem:[#allocation5 + $0x8] sm:$0xf]
    %v102 = vld [vmem:[#allocation5 + $0xc] sm:$0xf]
    %v103 = vld [vmem:[%s4] sm:$0x1]
    %v105 = vlaneseq
    %v106 = vshrl.u32 %v105, 7
    %v107 = vsub.s32 0, %v106
    %v108 = vrot.slane %v103, %v107
    %v114 = vunpack.c.l.b16 %v99
    %v115 = vunpack.c.l.b16 %v100
    %v116 = vunpack.c.l.b16 %v101
    %v117 = vunpack.c.l.b16 %v102
    %v118 = vpack.c.b16 %v115, %v114
    %v119 = vpack.c.b16 %v117, %v116
    %v123 = vsel %vm54, %v98, 0
    %125 = vmatprep.subr.bf16.mxu0 0
    %126 = vmatpush1.bf16.msra.mxu0 %v118
    %127 = vmatprep.subr.bf16.mxu0 0
    %128 = vmatpush1.bf16.msra.mxu0 %v119
    %129 = vmatprep.subr.bf16.mxu0 0
    %130 = vmatpush1.bf16.msra.mxu0 0
    %131 = vmatprep.subr.bf16.mxu0 0
    %132 = vmatpush1.bf16.msra.mxu0 0
    %133 = vmatprep.subr.bf16.mxu0 0
    %134 = vmatpush1.bf16.msra.mxu0 0
    %135 = vmatprep.subr.bf16.mxu0 0
    %136 = vmatpush1.bf16.msra.mxu0 0
    %137 = vmatprep.subr.bf16.mxu0 0
    %138 = vmatpush1.bf16.msra.mxu0 0
    %139 = vmatprep.subr.bf16.mxu0 0
    %140 = vmatpush1.bf16.msra.mxu0 0
    %141 = vmatprep.subr.bf16.mxu0 0
    %142 = vmatpush1.bf16.msra.mxu0 0
    %143 = vmatprep.subr.bf16.mxu0 0
    %144 = vmatpush1.bf16.msra.mxu0 0
    %145 = vmatprep.subr.bf16.mxu0 0
    %146 = vmatpush1.bf16.msra.mxu0 0
    %147 = vmatprep.subr.bf16.mxu0 0
    %148 = vmatpush1.bf16.msra.mxu0 0
    %149 = vmatprep.subr.bf16.mxu0 0
    %150 = vmatpush1.bf16.msra.mxu0 0
    %151 = vmatprep.subr.bf16.mxu0 0
    %152 = vmatpush1.bf16.msra.mxu0 0
    %153 = vmatprep.subr.bf16.mxu0 0
    %154 = vmatpush1.bf16.msra.mxu0 0
    %155 = vmatprep.subr.bf16.mxu0 0
    %156 = vmatpush1.bf16.msra.mxu0 0
    %157 = vmatprep.mubr.bf16.mxu0 0
    %158 = vmatmul.mubr.bf16.gmra.mrb[0].mxu0 %v123
    %v159 = vpop.f32.mrb[0].mxu0
    %v160 = vadd.f32 %v108, %v159
    %v161 = vpop.f32.mrb[0].mxu0
    %v162 = vpop.f32.mrb[0].mxu0
    %v163 = vadd.f32 %v108, %v162
    %v164 = vpop.f32.mrb[0].mxu0
    %165 = vdwg.mxu0
    %v166 = vpack.c.bf16 %v163, %v160
    %v168 = vunpack.c.l.b16 %v166
    %v169 = vunpack.c.h.b16 %v166
    %v170 = vpack.c.b16 %v168, %v168
    %v171 = vpack.c.b16 %v169, %v169
    %vm174 = vcmask 781312
    %175 = vst.msk [vmem:[#allocation7] sm:$0xf] %vm174, %v170
    %176 = vst.msk [vmem:[#allocation7 + $0x4] sm:$0xf] %vm174, %v171
    // Predicated region
    $region30: #{tpu_custom_call.1} parent=1 // pred_check
      _
    $region31: #{tpu_custom_call.1} parent=1 // pred_check_branch
      %178 = sbr.rel (0) target = $region33
    $region32: #{tpu_custom_call.1} parent=1 // pred_region
      %s180 = ssub.s32 128, 128
      %181 = vsyncadd [#allocation4], %s180
      %s182 = sshll.u32 [#allocation7], 4
      %s183 = int_to_ptr.vmem [resolvable:$true] %s182
      %188 = dma.vmem_to_hbm [thread:$0]  %s183, 128, %s5, [#allocation4], 64, 64, 4
    $region33: #{tpu_custom_call.1} parent=1 // pred_fallthru
      _
    // Predicated region
    $region34: #{tpu_custom_call.1} parent=1 // pred_check
      _
    $region35: #{tpu_custom_call.1} parent=1 // pred_check_branch
      %190 = sbr.rel (0) target = $region37
    $region36: #{tpu_custom_call.1} parent=1 // pred_region
      %191 = dma.done [#allocation4], 128
    $region37: #{tpu_custom_call.1} parent=1 // pred_fallthru
      _
    %192 = vsyncpa [#allocation3], 1
    %193 = vsyncpa [#allocation6], 1
    %194 = vsyncpa [#allocation4], 1

</llo_original>
